<compile_context>
chip_gen: v7x
topology: tpu7x:2x2x1
jax: 0.10.0
libtpu: 0.0.40
codegen_flags: <defaults>
</compile_context>

<pallas_src>
import functools

import jax
import jax.numpy as jnp
from jax.experimental import pallas as pl
from jax.experimental.pallas import tpu as pltpu


LANE = 128  # TPU lane width; the hidden dim of the resident weight is padded to this.


def _vmem_budget_bytes():
    """Generation-aware VMEM budget (~75% of physical). Used consistently for tile sizing
    AND the compiler vmem limit. v5e/v6e: 128 MiB physical; v7x: 64 MiB per TensorCore."""
    try:
        phys = int(pltpu.get_tpu_info().vmem_capacity_bytes)
    except Exception:
        phys = 64 << 20  # conservative fallback (v7x per-TC)
    return (phys * 3) // 4


def _mlp_kernel(x_ref, wt_ref, p_ref, o_ref, *, eps, h_valid):
    # x_ref:  (tm, C_in)     current input row tile (native dtype)
    # wt_ref: (C_in, H_pad)  transposed Linear weight, resident, single-buffered
    # p_ref:  (3, H_pad)     rows = [bias, gamma, beta], zero-padded past h_valid
    # o_ref:  (tm, H_out)    output tile, H_out == h_valid (unpadded store)

    # Linear: native-dtype operands straight into the MXU, accumulate in f32.
    h = jnp.dot(x_ref[...], wt_ref[...], preferred_element_type=jnp.float32)
    h = h + p_ref[0:1, :]  # bias; promotes to f32

    h_pad = h.shape[-1]
    inv_n = jnp.float32(1.0 / h_valid)
    if h_valid == h_pad:
        # No hidden padding: two-pass centered variance (biased, like torch).
        mean = jnp.mean(h, axis=-1, keepdims=True)
        centered = h - mean
        var = jnp.mean(centered * centered, axis=-1, keepdims=True)
    else:
        # Padded columns of h are exactly zero (W^T and bias zero-padded), so full-width
        # sums equal the sums over the true H. One-pass variance E[h^2] - mean^2 avoids
        # the iota/cmp/select lane mask (3 fewer full-tile VPU passes, one less temp).
        # Slightly less robust when |mean| >> std; acceptable post-Linear with f32 accum.
        mean = jnp.sum(h, axis=-1, keepdims=True) * inv_n
        var = jnp.sum(h * h, axis=-1, keepdims=True) * inv_n - mean * mean
        var = jnp.maximum(var, 0.0)  # guard tiny negative from f32 cancellation
        centered = h - mean

    y = centered * jax.lax.rsqrt(var + eps) * p_ref[1:2, :] + p_ref[2:3, :]
    y = jnp.maximum(y, 0.0)
    # Unpadded store: writes only the true H columns -> no HBM write amplification,
    # no post-kernel slice copy. (gamma/beta padding made the extra columns 0 anyway.)
    o_ref[...] = y[:, : o_ref.shape[-1]].astype(o_ref.dtype)


def _choose_tm(m, c_in, h_pad, h_out, x_itemsize, w_itemsize, out_itemsize, *, vmem_budget):
    """Pick the row tile: as large as possible (<= generation-aware target) within VMEM."""
    row_align = max(8, 32 // x_itemsize)
    # Bigger row tiles on 128 MiB-VMEM parts (v5e/v6e) amortize per-step overhead; keep
    # 512 on v7x's 64 MiB-per-TC budget.
    target_tm = 1024 if vmem_budget >= (80 << 20) else 512
    resident = (c_in + 3) * h_pad * w_itemsize           # single-buffered W^T + params
    per_row = (2 * c_in * x_itemsize                     # double-buffered input tile
               + 2 * h_out * out_itemsize                # double-buffered output tile
               + 4 * h_pad * 4)                          # f32 intermediates / spill headroom
    avail = max(vmem_budget - resident - (2 << 20), per_row * row_align)
    tm = min(target_tm, avail // per_row)
    tm = max(row_align, (tm // row_align) * row_align)
    m_ceil = -(-m // row_align) * row_align
    return int(min(tm, m_ceil))


def prepare_mlp_params(w, b, gamma, beta, *, lane=LANE):
    """One-time parameter prep (hoisted out of the forward path).

    w: (H, C_in) PyTorch Linear layout; b/gamma/beta: (H,).
    Returns W^T zero-padded along H to a multiple of `lane`, a stacked (3, H_pad) array of
    [bias, gamma, beta] (also zero-padded), and the true hidden size.
    """
    hidden, _ = w.shape
    h_pad = -(-hidden // lane) * lane
    wt = jnp.transpose(w)                               # (C_in, H)
    params = jnp.stack([b, gamma, beta], axis=0)        # (3, H)
    if h_pad != hidden:
        pad = h_pad - hidden
        wt = jnp.pad(wt, ((0, 0), (0, pad)))
        params = jnp.pad(params, ((0, 0), (0, pad)))
    return wt, params, hidden


def mlp_forward(x, wt, params, hidden, *, eps=1e-5, tm=None):
    """x: (..., C_in); wt/params/hidden from prepare_mlp_params()."""
    *lead, c_in = x.shape
    c_in_w, h_pad = wt.shape
    assert c_in == c_in_w, (c_in, c_in_w)

    x2 = x.reshape(-1, c_in)
    m = x2.shape[0]
    h_out = hidden  # unpadded output width

    budget = _vmem_budget_bytes()
    row_align = max(8, 32 // x.dtype.itemsize)

    if tm is None:
        tm = _choose_tm(m, c_in, h_pad, h_out,
                        x.dtype.itemsize, wt.dtype.itemsize, x.dtype.itemsize,
                        vmem_budget=budget)
        # Keep >= 2 grid steps so the "parallel" row axis can shard across both v7x
        # TensorCores and the x/out double-buffer pipeline stays warm on all parts.
        two_step_cap = -(-((m + 1) // 2) // row_align) * row_align
        tm = max(row_align, min(tm, two_step_cap))

    # Masked final tile; no full-input padding along M. Garbage-derived values in the
    # out-of-bounds rows (even NaN) never reach valid output: rows are independent and
    # OOB rows are discarded on writeback.
    grid_m = pl.cdiv(m, tm)

    # VMEM: resident W^T + params (single buffer each) + double-buffered x / out tiles
    # + f32 intermediates. Uses the SAME generation-aware budget as _choose_tm.
    vmem_need = (c_in * h_pad * wt.dtype.itemsize
                 + 3 * h_pad * params.dtype.itemsize
                 + 2 * tm * c_in * x.dtype.itemsize
                 + 2 * tm * h_out * x.dtype.itemsize
                 + 4 * tm * h_pad * 4)
    vmem_limit = int(min(max(vmem_need + (2 << 20), 16 << 20), budget))

    kernel = functools.partial(_mlp_kernel, eps=eps, h_valid=hidden)

    out = pl.pallas_call(
        kernel,
        out_shape=jax.ShapeDtypeStruct((m, h_out), x.dtype),
        grid_spec=pltpu.PrefetchScalarGridSpec(
            num_scalar_prefetch=0,
            grid=(grid_m,),
            in_specs=[
                pl.BlockSpec((tm, c_in), lambda i: (i, 0)),            # x row tile
                pl.BlockSpec((c_in, h_pad), lambda i: (0, 0),          # W^T: resident,
                             pipeline_mode=pl.Buffered(1)),            #   single-buffered
                pl.BlockSpec((3, h_pad), lambda i: (0, 0),             # [bias;gamma;beta]:
                             pipeline_mode=pl.Buffered(1)),            #   single-buffered
            ],
            out_specs=pl.BlockSpec((tm, h_out), lambda i: (i, 0)),
        ),
        compiler_params=pltpu.CompilerParams(
            dimension_semantics=("parallel",),   # row axis shards across TCs on v7x
            vmem_limit_bytes=vmem_limit),
    )(x2, wt, params)

    return out.reshape(*lead, hidden)


def init_mlp_params(key, in_channels, hidden_unit, dtype=jnp.float32):
    """Deterministic init matching nn.Linear default (uniform +-1/sqrt(in)) + LayerNorm defaults."""
    kw, kb = jax.random.split(key)
    bound = 1.0 / jnp.sqrt(jnp.float32(in_channels))
    w = jax.random.uniform(kw, (hidden_unit, in_channels), dtype, -bound, bound)
    b = jax.random.uniform(kb, (hidden_unit,), dtype, -bound, bound)
    gamma = jnp.ones((hidden_unit,), dtype)
    beta = jnp.zeros((hidden_unit,), dtype)
    return w, b, gamma, beta


if __name__ == "__main__":
    key = jax.random.PRNGKey(0)
    k_x, k_p = jax.random.split(key)

    batch, seq, in_channels, hidden_unit = 2, 8, 16, 32
    x = jax.random.normal(k_x, (batch, seq, in_channels), jnp.float32)
    w, b, gamma, beta = init_mlp_params(k_p, in_channels, hidden_unit)

    # One-time parameter prep (transpose + lane padding + stacking) outside the forward path.
    wt, params, hidden = prepare_mlp_params(w, b, gamma, beta)

    out = mlp_forward(x, wt, params, hidden)
    out = jax.block_until_ready(out)

    # Reference check in plain JAX (torch semantics: biased variance, eps inside sqrt).
    h_ref = x @ w.T + b
    mu = jnp.mean(h_ref, axis=-1, keepdims=True)
    var = jnp.mean((h_ref - mu) ** 2, axis=-1, keepdims=True)
    ref = jnp.maximum((h_ref - mu) / jnp.sqrt(var + 1e-5) * gamma + beta, 0.0)

    assert out.shape == (batch, seq, hidden_unit)
    assert jnp.allclose(out, ref, atol=3e-5, rtol=3e-5), float(jnp.max(jnp.abs(out - ref)))

    print("KERNEL_OK")
</pallas_src>

<mosaic_0001>
module attributes {stable_mosaic.version = 11 : i64} {
  func.func @_mlp_kernel(%arg0: i32, %arg1: memref<8x16xf32, #tpu.memory_space<vmem>>, %arg2: memref<16x128xf32, #tpu.memory_space<vmem>>, %arg3: memref<3x128xf32, #tpu.memory_space<vmem>>, %arg4: memref<8x32xf32, #tpu.memory_space<vmem>>) attributes {dimension_semantics = [#tpu.dimension_semantics<parallel>], iteration_bounds = array<i64: 2>, scalar_prefetch = 0 : i64, scratch_operands = 0 : i64, tpu.core_type = #tpu.core_type<tc>, window_params = [{transform_indices = @transform_0, window_bounds = array<i64: 8, 16>}, {pipeline_mode = #tpu.pipeline_mode<synchronous>, transform_indices = @transform_1, window_bounds = array<i64: 16, 128>}, {pipeline_mode = #tpu.pipeline_mode<synchronous>, transform_indices = @transform_2, window_bounds = array<i64: 3, 128>}, {transform_indices = @transform_3, window_bounds = array<i64: 8, 32>}]} {
    %c0 = arith.constant 0 : index
    %c0_0 = arith.constant 0 : index
    %0 = vector.load %arg1[%c0, %c0_0] : memref<8x16xf32, #tpu.memory_space<vmem>>, vector<8x16xf32>
    %c0_1 = arith.constant 0 : index
    %c0_2 = arith.constant 0 : index
    %1 = vector.load %arg2[%c0_1, %c0_2] : memref<16x128xf32, #tpu.memory_space<vmem>>, vector<16x128xf32>
    %cst = arith.constant dense<0.000000e+00> : vector<8x128xf32>
    %2 = tpu.matmul %0, %1, %cst {dimension_numbers = #tpu.dot_dimension_numbers<[1], [0], [0], [1], [0, 0, 1, 1], [], []>} : vector<8x16xf32>, vector<16x128xf32>, vector<8x128xf32> -> vector<8x128xf32>
    %c0_3 = arith.constant 0 : index
    %c0_4 = arith.constant 0 : index
    %3 = vector.load %arg3[%c0_3, %c0_4] : memref<3x128xf32, #tpu.memory_space<vmem>>, vector<1x128xf32>
    %4 = vector.broadcast %3 : vector<1x128xf32> to vector<8x128xf32>
    %5 = arith.addf %2, %4 : vector<8x128xf32>
    %cst_5 = arith.constant dense<0.000000e+00> : vector<8xf32>
    %6 = vector.multi_reduction <add>, %5, %cst_5 [1] : vector<8x128xf32> to vector<8xf32>
    %7 = vector.shape_cast %6 : vector<8xf32> to vector<8x1xf32>
    %cst_6 = arith.constant 3.125000e-02 : f32
    %8 = vector.broadcast %cst_6 : f32 to vector<8x1xf32>
    %9 = arith.mulf %7, %8 : vector<8x1xf32>
    %10 = arith.mulf %5, %5 : vector<8x128xf32>
    %cst_7 = arith.constant dense<0.000000e+00> : vector<8xf32>
    %11 = vector.multi_reduction <add>, %10, %cst_7 [1] : vector<8x128xf32> to vector<8xf32>
    %12 = vector.shape_cast %11 : vector<8xf32> to vector<8x1xf32>
    %cst_8 = arith.constant 3.125000e-02 : f32
    %13 = vector.broadcast %cst_8 : f32 to vector<8x1xf32>
    %14 = arith.mulf %12, %13 : vector<8x1xf32>
    %15 = arith.mulf %9, %9 : vector<8x1xf32>
    %16 = arith.subf %14, %15 : vector<8x1xf32>
    %cst_9 = arith.constant 0.000000e+00 : f32
    %17 = vector.broadcast %cst_9 : f32 to vector<8x1xf32>
    %18 = arith.maximumf %16, %17 : vector<8x1xf32>
    %19 = vector.broadcast %9 : vector<8x1xf32> to vector<8x128xf32>
    %20 = arith.subf %5, %19 : vector<8x128xf32>
    %cst_10 = arith.constant 9.99999974E-6 : f32
    %21 = vector.broadcast %cst_10 : f32 to vector<8x1xf32>
    %22 = arith.addf %18, %21 : vector<8x1xf32>
    %23 = math.rsqrt %22 : vector<8x1xf32>
    %24 = vector.broadcast %23 : vector<8x1xf32> to vector<8x128xf32>
    %25 = arith.mulf %20, %24 : vector<8x128xf32>
    %c1 = arith.constant 1 : index
    %c0_11 = arith.constant 0 : index
    %26 = vector.load %arg3[%c1, %c0_11] : memref<3x128xf32, #tpu.memory_space<vmem>>, vector<1x128xf32>
    %27 = vector.broadcast %26 : vector<1x128xf32> to vector<8x128xf32>
    %28 = arith.mulf %25, %27 : vector<8x128xf32>
    %c2 = arith.constant 2 : index
    %c0_12 = arith.constant 0 : index
    %29 = vector.load %arg3[%c2, %c0_12] : memref<3x128xf32, #tpu.memory_space<vmem>>, vector<1x128xf32>
    %30 = vector.broadcast %29 : vector<1x128xf32> to vector<8x128xf32>
    %31 = arith.addf %28, %30 : vector<8x128xf32>
    %cst_13 = arith.constant 0.000000e+00 : f32
    %32 = vector.broadcast %cst_13 : f32 to vector<8x128xf32>
    %33 = arith.maximumf %31, %32 : vector<8x128xf32>
    %34 = vector.extract_strided_slice %33 {offsets = [0, 0], sizes = [8, 32], strides = [1, 1]} : vector<8x128xf32> to vector<8x32xf32>
    %c0_14 = arith.constant 0 : index
    %c0_15 = arith.constant 0 : index
    %35 = vector.load %arg4[%c0_14, %c0_15] : memref<8x32xf32, #tpu.memory_space<vmem>>, vector<8x32xf32>
    tpu.vector_store %arg4[%c0_14, %c0_15], %34 {strides = array<i32>} : memref<8x32xf32, #tpu.memory_space<vmem>>, vector<8x32xf32>,
    return
  }
  func.func @transform_0(%arg0: i32) -> (i32, i32) {
    %c0_i32 = arith.constant 0 : i32
    %c0_i32_0 = arith.constant 0 : i32
    return %arg0, %c0_i32 : i32, i32
  }
  func.func @transform_1(%arg0: i32) -> (i32, i32) {
    %c0_i32 = arith.constant 0 : i32
    %c0_i32_0 = arith.constant 0 : i32
    %c0_i32_1 = arith.constant 0 : i32
    return %c0_i32, %c0_i32_0 : i32, i32
  }
  func.func @transform_2(%arg0: i32) -> (i32, i32) {
    %c0_i32 = arith.constant 0 : i32
    %c0_i32_0 = arith.constant 0 : i32
    %c0_i32_1 = arith.constant 0 : i32
    return %c0_i32, %c0_i32_0 : i32, i32
  }
  func.func @transform_3(%arg0: i32) -> (i32, i32) {
    %c0_i32 = arith.constant 0 : i32
    %c0_i32_0 = arith.constant 0 : i32
    return %arg0, %c0_i32 : i32, i32
  }
}

</mosaic_0001>

<llo_original>
// kernel: tpu_custom_call.1
$region0: #{tpu_custom_call.1}
  #allocation0 [shape = 'u32[]', space=smem, size = 0x4, offset = 0x4, fixed_abs, tag = 'smem constant byte address 0x4 - core index']
  #allocation1 [shape = 'u32[144,128]{1,0:T(1,128)}', space=vmem, size = 0x12000, scoped, tag = 'internal scratch']
  %s0 = inlined_call_operand.hbm [shape: f32[16,16], index: 0, kind: input, shape index: {}]
  %s1 = inlined_call_operand.hbm [shape: f32[16,128], index: 1, kind: input, shape index: {}]
  %s2 = inlined_call_operand.vmem [shape: f32[3,128], index: 2, kind: input, shape index: {}]
  %s3 = inlined_call_operand.hbm [shape: f32[16,32], index: 3, kind: output, shape index: {}]
  %s4 = sld [smem:[#allocation0]]
  $region53: #{tpu_custom_call.1} parent=0
    _
  %s6 = ssub.s32 1, %s4
  %s7 = scalar_select 0, %s6, %s4
  $region1: #{tpu_custom_call.1} parent=0
    #allocation2 [shape = 'u8[8192]{0}', space=vmem, size = 0x2000, scoped, tag = 'input window, operand 0']
    #allocation3 [shape = 's32[2]{0}', space=sflag, size = 0x8, scoped, tag = 'scoped memory for tpu_custom_call.1']
    #allocation4 [shape = 's32[2]{0}', space=sflag, size = 0x8, scoped, tag = 'scoped memory for tpu_custom_call.1']
    #allocation5 [shape = 'u8[8192]{0}', space=vmem, size = 0x2000, scoped, tag = 'input window, operand 1, single buffered']
    #allocation6 [shape = 's32[1]{0}', space=sflag, size = 0x4, scoped, tag = 'scoped memory for tpu_custom_call.1']
    #allocation7 [shape = 'u8[8192]{0}', space=vmem, size = 0x2000, scoped, tag = 'output window, operand 0']
    %8 = vsyncpa [#allocation3], 0
    %s9 = scalar_lea.sflag [#allocation3], 1
    %10 = vsyncpa %s9, 0
    %11 = vsyncpa [#allocation6], 0
    %12 = vsyncpa [#allocation4], 0
    %s13 = scalar_lea.sflag [#allocation4], 1
    %14 = vsyncpa %s13, 0
    loop: start=0, step=1, limit=4
    $region2: #{tpu_custom_call.1} parent=1 // loop_pre_header
      _
    $region3: #{tpu_custom_call.1} parent=1 // loop_header
      %s16 = sphi 0, %s20
      %p17 = scmp.ge.s32.totalorder %s16, 4
      %s26 = sphi 0, %s28
      %s29 = sphi 0, %s26
      %s30 = sphi 0, %s29
      %s46 = sphi 0, %s30
      %s50 = sphi 0, %s50
      %s52 = sphi 0, %s50
      %s53 = sphi 0, %s52
      %s67 = sphi 0, %s53
      %s71 = sphi 0, %s71
      %s73 = sphi 0, %s71
      %s74 = sphi 0, %s73
      %s88 = sphi 0, %s74
      %s94 = sphi 0, %s96
      %s97 = sphi 0, %s94
      %s98 = sphi 0, %s97
      %s114 = sphi 0, %s98
    $region4: #{tpu_custom_call.1} parent=1 // loop_header_branch
      %19 = sbr.rel (%p17) target = $region8
    $region5: #{tpu_custom_call.1} parent=1 // loop_body
      %s21 = ssub.s32 %s16, 1
      %s22 = ssub.s32 %s16, 2
      %s23 = sadd.s32 %s16, 1
      %s24 = ssub.s32 %s16, %s23
      %p25 = scmp.eq.s32.totalorder %s24, 0
      %s27 = sadd.s32 %s26, 1
      %s28 = scalar_select %p25, %s26, %s27
      %p31 = pneg %p25
      %p32 = scmp.eq.s32.totalorder %s16, 1
      %p33 = por %p31, %p32
      %p34 = scmp.ne.s32.totalorder %s26, %s29
      %p35 = scmp.eq.s32.totalorder %s16, 0
      %p36 = por %p34, %p35
      %p37 = scmp.ne.s32.totalorder %s26, %s29
      %p38 = scmp.eq.s32.totalorder %s21, 1
      %p39 = por %p37, %p38
      %p40 = scmp.ne.s32.totalorder %s29, %s30
      %p41 = scmp.eq.s32.totalorder %s21, 0
      %p42 = por %p40, %p41
      %p43 = scmp.ne.s32.totalorder %s29, %s30
      %p44 = scmp.eq.s32.totalorder %s22, 1
      %p45 = por %p43, %p44
      %p47 = scmp.ne.s32.totalorder %s30, %s46
      %p48 = scmp.eq.s32.totalorder %s22, 0
      %p49 = por %p47, %p48
      %s51 = sadd.s32 %s50, 1
      %p54 = scmp.eq.s32.totalorder %s16, 1
      %p55 = scmp.ne.s32.totalorder %s50, %s52
      %p56 = scmp.eq.s32.totalorder %s16, 0
      %p57 = por %p55, %p56
      %p58 = scmp.ne.s32.totalorder %s50, %s52
      %p59 = scmp.eq.s32.totalorder %s21, 1
      %p60 = por %p58, %p59
      %p61 = scmp.ne.s32.totalorder %s52, %s53
      %p62 = scmp.eq.s32.totalorder %s21, 0
      %p63 = por %p61, %p62
      %p64 = scmp.ne.s32.totalorder %s52, %s53
      %p65 = scmp.eq.s32.totalorder %s22, 1
      %p66 = por %p64, %p65
      %p68 = scmp.ne.s32.totalorder %s53, %s67
      %p69 = scmp.eq.s32.totalorder %s22, 0
      %p70 = por %p68, %p69
      %s72 = sadd.s32 %s71, 1
      %p75 = scmp.eq.s32.totalorder %s16, 1
      %p76 = scmp.ne.s32.totalorder %s71, %s73
      %p77 = scmp.eq.s32.totalorder %s16, 0
      %p78 = por %p76, %p77
      %p79 = scmp.ne.s32.totalorder %s71, %s73
      %p80 = scmp.eq.s32.totalorder %s21, 1
      %p81 = por %p79, %p80
      %p82 = scmp.ne.s32.totalorder %s73, %s74
      %p83 = scmp.eq.s32.totalorder %s21, 0
      %p84 = por %p82, %p83
      %p85 = scmp.ne.s32.totalorder %s73, %s74
      %p86 = scmp.eq.s32.totalorder %s22, 1
      %p87 = por %p85, %p86
      %p89 = scmp.ne.s32.totalorder %s74, %s88
      %p90 = scmp.eq.s32.totalorder %s22, 0
      %p91 = por %p89, %p90
      %s92 = ssub.s32 %s16, %s23
      %p93 = scmp.eq.s32.totalorder %s92, 0
      %s95 = sadd.s32 %s94, 1
      %s96 = scalar_select %p93, %s94, %s95
      %p99 = pneg %p93
      %p100 = scmp.eq.s32.totalorder %s16, 1
      %p101 = por %p99, %p100
      %p102 = scmp.ne.s32.totalorder %s94, %s97
      %p103 = scmp.eq.s32.totalorder %s16, 0
      %p104 = por %p102, %p103
      %p105 = scmp.ne.s32.totalorder %s94, %s97
      %p106 = scmp.eq.s32.totalorder %s21, 1
      %p107 = por %p105, %p106
      %p108 = scmp.ne.s32.totalorder %s97, %s98
      %p109 = scmp.eq.s32.totalorder %s21, 0
      %p110 = por %p108, %p109
      %p111 = scmp.ne.s32.totalorder %s97, %s98
      %p112 = scmp.eq.s32.totalorder %s22, 1
      %p113 = por %p111, %p112
      %p115 = scmp.ne.s32.totalorder %s98, %s114
      %p116 = scmp.eq.s32.totalorder %s22, 0
      %p117 = por %p115, %p116
      %p118 = scmp.le.s32.totalorder 1, %s16
      %p119 = scmp.lt.s32.totalorder %s16, 3
      %p120 = pnand %p118, %p119
      %p121 = pneg %p120
      // Predicated region
      $region9: #{tpu_custom_call.1} parent=5 // pred_check
        _
      $region10: #{tpu_custom_call.1} parent=5 // pred_check_branch
        %123 = sbr.rel (%p120) target = $region12
      $region11: #{tpu_custom_call.1} parent=5 // pred_region
        %s124 = ssub.s32 %s16, 1
        // Predicated region
        $region13: #{tpu_custom_call.1} parent=11 // pred_check
          %p125 = pneg %p63
        $region14: #{tpu_custom_call.1} parent=11 // pred_check_branch
          %127 = sbr.rel (%p125) target = $region16
        $region15: #{tpu_custom_call.1} parent=11 // pred_region
          %s129 = ssub.s32 256, 256
          %130 = vsyncadd [#allocation6], %s129
          %s131 = sshll.u32 [#allocation5], 4
          %s132 = int_to_ptr.vmem [resolvable:$true] %s131
          %137 = dma.hbm_to_vmem [thread:$0]  %s1, 256, %s132, [#allocation6], 128, 128, 8
        $region16: #{tpu_custom_call.1} parent=11 // pred_fallthru
          _
        // Predicated region
        $region17: #{tpu_custom_call.1} parent=11 // pred_check
          %p138 = pneg %p84
        $region18: #{tpu_custom_call.1} parent=11 // pred_check_branch
          %140 = sbr.rel (%p138) target = $region20
        $region19: #{tpu_custom_call.1} parent=11 // pred_region
          _
        $region20: #{tpu_custom_call.1} parent=11 // pred_fallthru
          _
      $region12: #{tpu_custom_call.1} parent=5 // pred_fallthru
        _
      %p141 = scmp.lt.s32.totalorder %s16, 2
      // Predicated region
      $region21: #{tpu_custom_call.1} parent=5 // pred_check
        %p142 = pneg %p141
      $region22: #{tpu_custom_call.1} parent=5 // pred_check_branch
        %144 = sbr.rel (%p142) target = $region24
      $region23: #{tpu_custom_call.1} parent=5 // pred_region
        // Predicated region
        $region25: #{tpu_custom_call.1} parent=23 // pred_check
          %p145 = pneg %p36
        $region26: #{tpu_custom_call.1} parent=23 // pred_check_branch
          %147 = sbr.rel (%p145) target = $region28
        $region27: #{tpu_custom_call.1} parent=23 // pred_region
          %s148 = sand.u32 %s26, 1
          %s149 = scalar_lea.sflag [#allocation3], %s148
          %s150 = sand.u32 %s26, 1
          %s151 = smul.addr %s150, 8
          %s152 = scalar_lea.vmem [#allocation2], %s151
          %s154 = ssub.s32 128, 128
          %155 = vsyncadd %s149, %s154
          %s156 = smul.addr %s16, 128
          %s157 = scalar_lea.hbm %s0, %s156
          %s159 = sshll.u32 %s152, 4
          %s160 = int_to_ptr.vmem [resolvable:$true] %s159
          %162 = dma.hbm_to_vmem [thread:$0]  %s157, 128, %s160, %s149
        $region28: #{tpu_custom_call.1} parent=23 // pred_fallthru
          _
      $region24: #{tpu_custom_call.1} parent=5 // pred_fallthru
        _
      %p163 = scmp.le.s32.totalorder 1, %s16
      %p164 = scmp.lt.s32.totalorder %s16, 3
      %p165 = pnand %p163, %p164
      %p166 = pneg %p165
      // Predicated region
      $region29: #{tpu_custom_call.1} parent=5 // pred_check
        _
      $region30: #{tpu_custom_call.1} parent=5 // pred_check_branch
        %168 = sbr.rel (%p165) target = $region32
      $region31: #{tpu_custom_call.1} parent=5 // pred_region
        %s169 = ssub.s32 %s16, 1
        %s170 = sand.u32 %s29, 1
        %s171 = scalar_lea.sflag [#allocation3], %s170
        %s172 = sand.u32 %s29, 1
        %s173 = smul.addr %s172, 8
        %s174 = scalar_lea.vmem [#allocation2], %s173
        // Predicated region
        $region33: #{tpu_custom_call.1} parent=31 // pred_check
          %p175 = pneg %p42
        $region34: #{tpu_custom_call.1} parent=31 // pred_check_branch
          %177 = sbr.rel (%p175) target = $region36
        $region35: #{tpu_custom_call.1} parent=31 // pred_region
          %178 = dma.done %s171, 128
        $region36: #{tpu_custom_call.1} parent=31 // pred_fallthru
          _
        // Predicated region
        $region37: #{tpu_custom_call.1} parent=31 // pred_check
          %p179 = pneg %p63
        $region38: #{tpu_custom_call.1} parent=31 // pred_check_branch
          %181 = sbr.rel (%p179) target = $region40
        $region39: #{tpu_custom_call.1} parent=31 // pred_region
          %182 = dma.done [#allocation6], 256
        $region40: #{tpu_custom_call.1} parent=31 // pred_fallthru
          _
        %s183 = sand.u32 %s29, 1
        %s184 = scalar_lea.sflag [#allocation3], %s183
        %s185 = sand.u32 %s29, 1
        %s186 = smul.addr %s185, 8
        %s187 = scalar_lea.vmem [#allocation2], %s186
        %p188 = pneg %p42
        %p189 = pneg %p39
        %p190 = pneg %p63
        %p191 = pneg %p60
        %p192 = pneg %p84
        %p193 = pneg %p81
        %p194 = pneg %p110
        %p195 = pneg %p107
        %s196 = sand.u32 %s97, 1
        %s197 = scalar_lea.sflag [#allocation4], %s196
        %s198 = sand.u32 %s97, 1
        %s199 = smul.addr %s198, 8
        %s200 = scalar_lea.vmem [#allocation7], %s199
        %v201 = vld [vmem:[%s174] sm:$0xff]
        %v202 = vld [vmem:[#allocation5] sm:$0xff]
        %v203 = vld [vmem:[#allocation5 + $0x8] sm:$0xff]
        %v204 = vld [vmem:[%s2] sm:$0x1]
        %v205 = vlaneseq
        %v206 = vshrl.u32 %v205, 7
        %v207 = vsub.s32 0, %v206
        %v208 = vrot.slane %v204, %v207
        %vm209 = vcmask 130048
        %v211 = vsel %vm209, %v201, 0
        %213 = vmatprep.subr.mxu0 0.0
        %214 = vmatpush1.msra.mxu0 %v202
        %215 = vmatprep.subr.mxu0 0.0
        %216 = vmatpush1.msra.mxu0 %v203
        %217 = vmatprep.subr.mxu0 0.0
        %218 = vmatpush1.msra.mxu0 0.0
        %219 = vmatprep.subr.mxu0 0.0
        %220 = vmatpush1.msra.mxu0 0.0
        %221 = vmatprep.subr.mxu0 0.0
        %222 = vmatpush1.msra.mxu0 0.0
        %223 = vmatprep.subr.mxu0 0.0
        %224 = vmatpush1.msra.mxu0 0.0
        %225 = vmatprep.subr.mxu0 0.0
        %226 = vmatpush1.msra.mxu0 0.0
        %227 = vmatprep.subr.mxu0 0.0
        %228 = vmatpush1.msra.mxu0 0.0
        %229 = vmatprep.subr.mxu0 0.0
        %230 = vmatpush1.msra.mxu0 0.0
        %231 = vmatprep.subr.mxu0 0.0
        %232 = vmatpush1.msra.mxu0 0.0
        %233 = vmatprep.subr.mxu0 0.0
        %234 = vmatpush1.msra.mxu0 0.0
        %235 = vmatprep.subr.mxu0 0.0
        %236 = vmatpush1.msra.mxu0 0.0
        %237 = vmatprep.subr.mxu0 0.0
        %238 = vmatpush1.msra.mxu0 0.0
        %239 = vmatprep.subr.mxu0 0.0
        %240 = vmatpush1.msra.mxu0 0.0
        %241 = vmatprep.subr.mxu0 0.0
        %242 = vmatpush1.msra.mxu0 0.0
        %243 = vmatprep.subr.mxu0 0.0
        %244 = vmatpush1.msra.mxu0 0.0
        %245 = vmatprep.subr.mxu0 0.0
        %246 = vmatpush1.msra.mxu0 0.0
        %247 = vmatprep.subr.mxu0 0.0
        %248 = vmatpush1.msra.mxu0 0.0
        %249 = vmatprep.subr.mxu0 0.0
        %250 = vmatpush1.msra.mxu0 0.0
        %251 = vmatprep.subr.mxu0 0.0
        %252 = vmatpush1.msra.mxu0 0.0
        %253 = vmatprep.subr.mxu0 0.0
        %254 = vmatpush1.msra.mxu0 0.0
        %255 = vmatprep.subr.mxu0 0.0
        %256 = vmatpush1.msra.mxu0 0.0
        %257 = vmatprep.subr.mxu0 0.0
        %258 = vmatpush1.msra.mxu0 0.0
        %259 = vmatprep.subr.mxu0 0.0
        %260 = vmatpush1.msra.mxu0 0.0
        %261 = vmatprep.subr.mxu0 0.0
        %262 = vmatpush1.msra.mxu0 0.0
        %263 = vmatprep.subr.mxu0 0.0
        %264 = vmatpush1.msra.mxu0 0.0
        %265 = vmatprep.subr.mxu0 0.0
        %266 = vmatpush1.msra.mxu0 0.0
        %267 = vmatprep.subr.mxu0 0.0
        %268 = vmatpush1.msra.mxu0 0.0
        %269 = vmatprep.subr.mxu0 0.0
        %270 = vmatpush1.msra.mxu0 0.0
        %271 = vmatprep.subr.mxu0 0.0
        %272 = vmatpush1.msra.mxu0 0.0
        %273 = vmatprep.subr.mxu0 0.0
        %274 = vmatpush1.msra.mxu0 0.0
        %275 = vmatprep.subr.mxu0 0.0
        %276 = vmatpush1.msra.mxu0 0.0
        %277 = vmatprep.mubr.f32.mxu0 0.0
        %278 = vmatmul.mubr.f32.gmra.mrb[0].mxu0 %v211
        %v279 = vpop.f32.mrb[0].mxu0
        %v280 = vadd.f32 %v208, %v279
        %v281 = vpop.f32.mrb[0].mxu0
        %282 = vdwg.mxu0
        %283 = vadd.xlane.f32.xlu0 %v280
        %v284 = vpop.xlane.xlu0 %283
        %v285 = vmul.f32 %v284, 0.03125
        %v286 = vmul.f32 %v280, %v280
        %287 = vadd.xlane.f32.xlu0 %v286
        %v288 = vpop.xlane.xlu0 %287
        %v289 = vmul.f32 %v288, 0.03125
        %v290 = vmul.f32 %v285, %v285
        %v291 = vsub.f32 %v289, %v290
        %v292 = vmax.f32 %v291, 0.0
        %v293 = vsub.f32 %v280, %v285
        %v294 = vadd.f32 %v292, 1e-05
        %v295 = vrsqrt.pop %v294
        %v296 = vmul.f32 %v293, %v295
        %v297 = vld [vmem:[%s2 + $0x1] sm:$0x1]
        %v298 = vlaneseq
        %v299 = vshrl.u32 %v298, 7
        %v300 = vsub.s32 0, %v299
        %v301 = vrot.slane %v297, %v300
        %v302 = vmul.f32 %v296, %v301
        %v303 = vld [vmem:[%s2 + $0x2] sm:$0x1]
        %v304 = vlaneseq
        %v305 = vshrl.u32 %v304, 7
        %v306 = vsub.s32 0, %v305
        %v307 = vrot.slane %v303, %v306
        %v308 = vadd.f32 %v302, %v307
        %v309 = vmax.f32 %v308, 0.0
        %vm310 = vcmask 261120
        %311 = vst.msk [vmem:[%s200] sm:$0xff] %vm310, %v309
        %s312 = sand.u32 %s97, 1
        %s313 = scalar_lea.sflag [#allocation4], %s312
        %s314 = sand.u32 %s97, 1
        %s315 = smul.addr %s314, 8
        %s316 = scalar_lea.vmem [#allocation7], %s315
        // Predicated region
        $region41: #{tpu_custom_call.1} parent=31 // pred_check
          %p317 = pneg %p107
        $region42: #{tpu_custom_call.1} parent=31 // pred_check_branch
          %319 = sbr.rel (%p317) target = $region44
        $region43: #{tpu_custom_call.1} parent=31 // pred_region
          %s321 = ssub.s32 128, 128
          %322 = vsyncadd %s313, %s321
          %s323 = smul.addr %s21, 128
          %s324 = scalar_lea.hbm %s3, %s323
          %s326 = sshll.u32 %s316, 4
          %s327 = int_to_ptr.vmem [resolvable:$true] %s326
          %329 = dma.vmem_to_hbm [thread:$0]  %s327, 128, %s324, %s313
        $region44: #{tpu_custom_call.1} parent=31 // pred_fallthru
          _
      $region32: #{tpu_custom_call.1} parent=5 // pred_fallthru
        _
      %p330 = scmp.le.s32.totalorder 2, %s16
      // Predicated region
      $region45: #{tpu_custom_call.1} parent=5 // pred_check
        %p331 = pneg %p330
      $region46: #{tpu_custom_call.1} parent=5 // pred_check_branch
        %333 = sbr.rel (%p331) target = $region48
      $region47: #{tpu_custom_call.1} parent=5 // pred_region
        %s334 = ssub.s32 %s16, 2
        // Predicated region
        $region49: #{tpu_custom_call.1} parent=47 // pred_check
          %p335 = pneg %p113
        $region50: #{tpu_custom_call.1} parent=47 // pred_check_branch
          %337 = sbr.rel (%p335) target = $region52
        $region51: #{tpu_custom_call.1} parent=47 // pred_region
          %s338 = sand.u32 %s98, 1
          %s339 = scalar_lea.sflag [#allocation4], %s338
          %s340 = sand.u32 %s98, 1
          %s341 = smul.addr %s340, 8
          %s342 = scalar_lea.vmem [#allocation7], %s341
          %343 = dma.done %s339, 128
        $region52: #{tpu_custom_call.1} parent=47 // pred_fallthru
          _
      $region48: #{tpu_custom_call.1} parent=5 // pred_fallthru
        _
    $region6: #{tpu_custom_call.1} parent=1 // loop_footer
      %s20 = sadd.s32 1, %s16
    $region7: #{tpu_custom_call.1} parent=1 // loop_footer_branch
      %15 = sbr.rel target = $region3
    $region8: #{tpu_custom_call.1} parent=1 // loop_exit
      _
    %344 = vsyncpa [#allocation3], 1
    %s345 = scalar_lea.sflag [#allocation3], 1
    %346 = vsyncpa %s345, 1
    %347 = vsyncpa [#allocation6], 1
    %348 = vsyncpa [#allocation4], 1
    %s349 = scalar_lea.sflag [#allocation4], 1
    %350 = vsyncpa %s349, 1

</llo_original>
